<compile_context>
chip_gen: v6e
topology: v6e:2x2x1
jax: 0.10.0
libtpu: 0.0.40
codegen_flags: <defaults>
</compile_context>

<pallas_src>
import functools

import jax
import jax.numpy as jnp
from jax import lax
from jax.experimental import pallas as pl
from jax.experimental.pallas import tpu as pltpu


# ------------------------------ helpers -------------------------------------


def _round_up(x, m):
    return (x + m - 1) // m * m


def _pad_dim(n):
    # Lane / MXU friendly padding: minimum 128; 256-aligned beyond that so 256-wide
    # N/K tiles (v6e / v7x MXUs are 2x256^2) divide the padded extent evenly.
    if n <= 128:
        return 128
    return _round_up(n, 256)


def _vmem_budget_bytes():
    """Per-generation VMEM budget for tile selection (~75% of physical)."""
    try:
        info = pltpu.get_tpu_info()
        cap = int(getattr(info, "vmem_capacity_bytes", 0) or 0)
        if cap > 0:
            return (cap * 3) // 4
    except Exception:
        pass
    # Unknown chip: assume v7x's 64 MiB -> 48 MiB budget (safe on every generation).
    return 48 * 1024 * 1024


def _pick_tiles(b_pad, d_pad, c_pad, in_bytes, out_bytes, budget, row_align, fused):
    """Greedy, budget-aware tile pick.  Preference order:
       1) W fully VMEM-resident (tk = d_pad, tn = c_pad) -> fetched from HBM once,
       2) wide, 256-aligned N/K tiles (lane-dense stores, full MXU columns),
       3) large tm, but keeping >= 2 M tiles when the batch allows (v7x dual TC)."""
    tm_all = [t for t in (1024, 512, 256, 128, 64, 32, 16, 8)
              if t % row_align == 0 and b_pad % t == 0]
    if not tm_all:
        tm_all = [b_pad]
    tm_pref = [t for t in tm_all if b_pad // t >= 2] or tm_all

    sub = (2048, 1024, 512, 256, 128)
    tk_cands = [d_pad] + [t for t in sub if t < d_pad and d_pad % t == 0]
    tn_cands = [c_pad] if fused else [c_pad] + [t for t in sub if t < c_pad and c_pad % t == 0]

    def fp(tm, tn, tk):
        f = (2 * tm * tk * in_bytes          # x blocks (double buffered)
             + 2 * tk * tn * in_bytes        # W blocks (double buffered)
             + tm * tn * 4                   # f32 accumulator scratch
             + 2 * tm * tn * out_bytes       # logits out blocks (double buffered)
             + 2 * tn * 4)                   # bias blocks
        if fused:
            f += 2 * tm * 4 + 2 * tm * 4     # label in + nll out blocks
        return f

    for tk in tk_cands:
        for tn in tn_cands:
            for tm in tm_pref:
                f = fp(tm, tn, tk)
                if f <= budget:
                    return tm, tn, tk, f
    if fused:
        return None  # caller falls back to the unfused kernel + JAX CE
    tm, tn, tk = tm_all[-1], tn_cands[-1], tk_cands[-1]
    return tm, tn, tk, fp(tm, tn, tk)


# ------------------------------ kernels -------------------------------------


def _linear_kernel(x_ref, wt_ref, b_ref, o_ref, acc_ref):
    """One (tm, tn) output tile of x @ W^T + b, accumulated over the K grid axis.
    When nk == nn == 1 the W index map is constant so W stays VMEM-resident."""
    k = pl.program_id(2)

    @pl.when(k == 0)
    def _():
        acc_ref[...] = jnp.zeros_like(acc_ref)

    acc_ref[...] += jnp.dot(x_ref[...], wt_ref[...],
                            preferred_element_type=jnp.float32)

    @pl.when(k == pl.num_programs(2) - 1)
    def _():
        o_ref[...] = (acc_ref[...] + b_ref[...].astype(jnp.float32)).astype(o_ref.dtype)


def _fused_linear_ce_kernel(x_ref, wt_ref, b_ref, lab_ref,
                            logits_ref, nll_ref, acc_ref, *, n_classes):
    """Fused linear + per-row NLL.  Grid = (M tiles, K tiles); the full padded class
    width stays in one block so the row-wise logsumexp needs no cross-tile reduction."""
    k = pl.program_id(1)

    @pl.when(k == 0)
    def _():
        acc_ref[...] = jnp.zeros_like(acc_ref)

    acc_ref[...] += jnp.dot(x_ref[...], wt_ref[...],
                            preferred_element_type=jnp.float32)

    @pl.when(k == pl.num_programs(1) - 1)
    def _():
        logits = acc_ref[...] + b_ref[...].astype(jnp.float32)   # f32
        logits_ref[...] = logits.astype(logits_ref.dtype)

        tm, c_pad = logits.shape
        cls = lax.broadcasted_iota(jnp.int32, (tm, c_pad), 1)
        # Mask padded class columns out of the logsumexp (f32; -1e30 not representable
        # in bf16, so this math must stay f32).
        masked = jnp.where(cls < n_classes, logits, jnp.float32(-1e30))
        m = jnp.max(masked, axis=-1, keepdims=True)
        lse = jnp.log(jnp.sum(jnp.exp(masked - m), axis=-1, keepdims=True)) + m

        lab = lab_ref[...]                                        # (tm, 1) int32
        picked = jnp.sum(jnp.where(cls == lab, logits, 0.0),
                         axis=-1, keepdims=True)                  # gather via iota compare
        nll_ref[...] = lse - picked


# ------------------------------ wrappers ------------------------------------


def prepare_params(weight, bias, compute_dtype=jnp.float32):
    """One-time parameter prep: transpose PyTorch (out, in) weight to (in, out), pad to
    lane/MXU friendly extents.  Done once, not per forward call."""
    out_dim, in_dim = weight.shape
    d_pad, c_pad = _pad_dim(in_dim), _pad_dim(out_dim)
    wt_p = jnp.zeros((d_pad, c_pad), compute_dtype)
    wt_p = wt_p.at[:in_dim, :out_dim].set(weight.T.astype(compute_dtype))
    b_p = jnp.zeros((1, c_pad), jnp.float32)
    b_p = b_p.at[:, :out_dim].set(bias.astype(jnp.float32))
    return wt_p, b_p


@functools.partial(jax.jit, static_argnames=("out_dim", "compute_dtype"))
def lr_forward(x, wt_p, b_p, labels=None, *, out_dim, compute_dtype=jnp.float32):
    """Mirror of LR.forward(input_feats, labels=None)."""
    batch, in_dim = x.shape
    d_pad, c_pad = wt_p.shape
    in_bytes = jnp.dtype(compute_dtype).itemsize
    out_dtype = compute_dtype
    out_bytes = jnp.dtype(out_dtype).itemsize
    row_align = 8 * max(1, 4 // in_bytes)          # f32 -> 8 rows, bf16 -> 16 rows
    b_pad = _round_up(batch, row_align)
    budget = int(_vmem_budget_bytes())

    # Skip the wrapper-side padding copy entirely when x is already kernel friendly.
    if batch == b_pad and in_dim == d_pad and x.dtype == jnp.dtype(compute_dtype):
        x_p = x
    else:
        x_p = jnp.zeros((b_pad, d_pad), compute_dtype)
        x_p = x_p.at[:batch, :in_dim].set(x.astype(compute_dtype))

    flops = 2 * b_pad * d_pad * c_pad
    bytes_in = b_pad * d_pad * in_bytes + d_pad * c_pad * in_bytes + c_pad * 4

    def run_linear():
        tm, tn, tk, _ = _pick_tiles(b_pad, d_pad, c_pad, in_bytes, out_bytes,
                                    budget, row_align, fused=False)
        nm, nn, nk = b_pad // tm, c_pad // tn, d_pad // tk
        return pl.pallas_call(
            _linear_kernel,
            out_shape=jax.ShapeDtypeStruct((b_pad, c_pad), out_dtype),
            grid_spec=pltpu.PrefetchScalarGridSpec(
                num_scalar_prefetch=0,
                grid=(nm, nn, nk),
                in_specs=[
                    pl.BlockSpec((tm, tk), lambda i, j, k: (i, k)),
                    # In the common (budget-permitting) case nk == nn == 1, so this index
                    # map is constant across the grid -> W is fetched from HBM only once.
                    pl.BlockSpec((tk, tn), lambda i, j, k: (k, j)),
                    pl.BlockSpec((1, tn), lambda i, j, k: (0, j)),
                ],
                out_specs=pl.BlockSpec((tm, tn), lambda i, j, k: (i, j)),
                scratch_shapes=[pltpu.VMEM((tm, tn), jnp.float32)],
            ),
            compiler_params=pltpu.CompilerParams(
                dimension_semantics=("parallel", "parallel", "arbitrary"),
                vmem_limit_bytes=budget,
            ),
            cost_estimate=pl.CostEstimate(
                flops=flops, transcendentals=0,
                bytes_accessed=bytes_in + b_pad * c_pad * out_bytes),
        )(x_p, wt_p, b_p)

    if labels is None:
        logits_p = run_linear()
        if batch == b_pad and out_dim == c_pad:
            return logits_p
        return logits_p[:batch, :out_dim]

    # ---------------- labels path: fused matmul + cross-entropy ----------------
    if batch == b_pad:
        lab_p = labels.astype(jnp.int32).reshape(b_pad, 1)
    else:
        lab_p = jnp.zeros((b_pad, 1), jnp.int32)
        lab_p = lab_p.at[:batch, 0].set(labels.astype(jnp.int32))

    tiles = _pick_tiles(b_pad, d_pad, c_pad, in_bytes, out_bytes, budget,
                        row_align, fused=True)
    if tiles is None:
        # Full-class-width blocks do not fit the VMEM budget (very large class count):
        # stay correct by computing logits with the tiled kernel and CE in plain JAX.
        # TODO(synk): class-tiled online (flash-style) logsumexp inside the kernel.
        logits_p = run_linear()
        outputs = logits_p[:batch, :out_dim]
        lg = outputs.astype(jnp.float32)
        lse = jax.scipy.special.logsumexp(lg, axis=-1)
        picked = jnp.take_along_axis(lg, labels.astype(jnp.int32)[:, None], axis=-1)[:, 0]
        loss = jnp.mean(lse - picked)
        return loss, outputs

    tm, _, tk, _ = tiles
    nm, nk = b_pad // tm, d_pad // tk
    kernel = functools.partial(_fused_linear_ce_kernel, n_classes=out_dim)
    logits_p, nll_p = pl.pallas_call(
        kernel,
        out_shape=(
            jax.ShapeDtypeStruct((b_pad, c_pad), out_dtype),
            jax.ShapeDtypeStruct((b_pad, 1), jnp.float32),
        ),
        grid_spec=pltpu.PrefetchScalarGridSpec(
            num_scalar_prefetch=0,
            grid=(nm, nk),
            in_specs=[
                pl.BlockSpec((tm, tk), lambda i, k: (i, k)),
                # nk == 1 (budget permitting) -> constant index map, W VMEM-resident.
                pl.BlockSpec((tk, c_pad), lambda i, k: (k, 0)),
                pl.BlockSpec((1, c_pad), lambda i, k: (0, 0)),
                pl.BlockSpec((tm, 1), lambda i, k: (i, 0)),
            ],
            out_specs=(
                pl.BlockSpec((tm, c_pad), lambda i, k: (i, 0)),
                pl.BlockSpec((tm, 1), lambda i, k: (i, 0)),
            ),
            scratch_shapes=[pltpu.VMEM((tm, c_pad), jnp.float32)],
        ),
        compiler_params=pltpu.CompilerParams(
            dimension_semantics=("parallel", "arbitrary"),
            vmem_limit_bytes=budget,
        ),
        cost_estimate=pl.CostEstimate(
            flops=flops + 6 * b_pad * c_pad,
            transcendentals=b_pad * c_pad,
            bytes_accessed=bytes_in + b_pad * 4 + b_pad * c_pad * out_bytes + b_pad * 4),
    )(x_p, wt_p, b_p, lab_p)

    if batch == b_pad and out_dim == c_pad:
        outputs = logits_p
    else:
        outputs = logits_p[:batch, :out_dim]
    # Per-row NLL comes from the kernel; the final mean over `batch` scalars is trivial
    # glue kept outside so the M grid axis stays megacore-parallel.
    loss = jnp.sum(nll_p[:batch, 0]) / batch
    return loss, outputs


# ------------------------------ main -----------------------------------------

if __name__ == "__main__":
    batch, input_dim, output_dim = 8, 32, 16

    key = jax.random.PRNGKey(0)
    kx, kw, kb, kl = jax.random.split(key, 4)

    # Deterministic nn.Linear-style init: U(-1/sqrt(in), 1/sqrt(in)).
    bound = 1.0 / (input_dim ** 0.5)
    weight = jax.random.uniform(kw, (output_dim, input_dim), jnp.float32, -bound, bound)
    bias = jax.random.uniform(kb, (output_dim,), jnp.float32, -bound, bound)
    x = jax.random.normal(kx, (batch, input_dim), jnp.float32)
    labels = jax.random.randint(kl, (batch,), 0, output_dim)

    # Plain-JAX reference.
    ref_out = x @ weight.T + bias
    ref_lse = jax.scipy.special.logsumexp(ref_out, axis=-1)
    ref_loss = jnp.mean(ref_lse - ref_out[jnp.arange(batch), labels])

    # --- f32 path (exact nn.Linear semantics) ---
    wt_p, b_p = prepare_params(weight, bias, jnp.float32)

    outputs = lr_forward(x, wt_p, b_p, out_dim=output_dim)
    outputs = jax.block_until_ready(outputs)
    assert jnp.allclose(outputs, ref_out, atol=1e-5, rtol=1e-5)

    loss, outputs2 = lr_forward(x, wt_p, b_p, labels, out_dim=output_dim)
    loss, outputs2 = jax.block_until_ready((loss, outputs2))
    assert jnp.allclose(outputs2, ref_out, atol=1e-5, rtol=1e-5)
    assert jnp.allclose(loss, ref_loss, atol=1e-5, rtol=1e-5)

    # --- bf16 MXU path (f32 accumulate, f32 softmax math, bf16 logits writeback) ---
    wt_bf, b_bf = prepare_params(weight, bias, jnp.bfloat16)
    loss_bf, out_bf = lr_forward(x, wt_bf, b_bf, labels,
                                 out_dim=output_dim, compute_dtype=jnp.bfloat16)
    loss_bf, out_bf = jax.block_until_ready((loss_bf, out_bf))
    assert jnp.allclose(out_bf.astype(jnp.float32), ref_out, atol=5e-2, rtol=5e-2)
    assert jnp.allclose(loss_bf, ref_loss, atol=5e-2, rtol=5e-2)

    print("KERNEL_OK")
</pallas_src>

<mosaic_0001>
module attributes {stable_mosaic.version = 11 : i64} {
  func.func @_linear_kernel(%arg0: i32, %arg1: i32, %arg2: i32, %arg3: memref<8x128xf32, #tpu.memory_space<vmem>>, %arg4: memref<128x128xf32, #tpu.memory_space<vmem>>, %arg5: memref<1x128xf32, #tpu.memory_space<vmem>>, %arg6: memref<8x128xf32, #tpu.memory_space<vmem>>, %arg7: memref<8x128xf32, #tpu.memory_space<vmem>>) attributes {dimension_semantics = [#tpu.dimension_semantics<parallel>, #tpu.dimension_semantics<parallel>, #tpu.dimension_semantics<arbitrary>], iteration_bounds = array<i64: 1, 1, 1>, scalar_prefetch = 0 : i64, scratch_operands = 1 : i64, tpu.core_type = #tpu.core_type<tc>, window_params = [{transform_indices = @transform_0, window_bounds = array<i64: 8, 128>}, {transform_indices = @transform_1, window_bounds = array<i64: 128, 128>}, {transform_indices = @transform_2, window_bounds = array<i64: 1, 128>}, {transform_indices = @transform_3, window_bounds = array<i64: 8, 128>}]} {
    %c0_i32 = arith.constant 0 : i32
    %0 = arith.cmpi eq, %arg2, %c0_i32 : i32
    %1 = arith.extui %0 : i1 to i32
    %c0_i32_0 = arith.constant 0 : i32
    %2 = arith.cmpi ne, %1, %c0_i32_0 : i32
    scf.if %2 {
      %cst_10 = arith.constant 0.000000e+00 : f32
      %12 = vector.broadcast %cst_10 : f32 to vector<8x128xf32>
      %c0_11 = arith.constant 0 : index
      %c0_12 = arith.constant 0 : index
      %13 = vector.load %arg7[%c0_11, %c0_12] : memref<8x128xf32, #tpu.memory_space<vmem>>, vector<8x128xf32>
      tpu.vector_store %arg7[%c0_11, %c0_12], %12 {strides = array<i32>} : memref<8x128xf32, #tpu.memory_space<vmem>>, vector<8x128xf32>,
    } else {
    }
    %c0 = arith.constant 0 : index
    %c0_1 = arith.constant 0 : index
    %3 = vector.load %arg7[%c0, %c0_1] : memref<8x128xf32, #tpu.memory_space<vmem>>, vector<8x128xf32>
    %c0_2 = arith.constant 0 : index
    %c0_3 = arith.constant 0 : index
    %4 = vector.load %arg3[%c0_2, %c0_3] : memref<8x128xf32, #tpu.memory_space<vmem>>, vector<8x128xf32>
    %c0_4 = arith.constant 0 : index
    %c0_5 = arith.constant 0 : index
    %5 = vector.load %arg4[%c0_4, %c0_5] : memref<128x128xf32, #tpu.memory_space<vmem>>, vector<128x128xf32>
    %cst = arith.constant dense<0.000000e+00> : vector<8x128xf32>
    %6 = tpu.matmul %4, %5, %cst {dimension_numbers = #tpu.dot_dimension_numbers<[1], [0], [0], [1], [0, 0, 1, 1], [], []>} : vector<8x128xf32>, vector<128x128xf32>, vector<8x128xf32> -> vector<8x128xf32>
    %7 = arith.addf %3, %6 : vector<8x128xf32>
    %c0_6 = arith.constant 0 : index
    %c0_7 = arith.constant 0 : index
    %8 = vector.load %arg7[%c0_6, %c0_7] : memref<8x128xf32, #tpu.memory_space<vmem>>, vector<8x128xf32>
    tpu.vector_store %arg7[%c0_6, %c0_7], %7 {strides = array<i32>} : memref<8x128xf32, #tpu.memory_space<vmem>>, vector<8x128xf32>,
    %c0_i32_8 = arith.constant 0 : i32
    %9 = arith.cmpi eq, %arg2, %c0_i32_8 : i32
    %10 = arith.extui %9 : i1 to i32
    %c0_i32_9 = arith.constant 0 : i32
    %11 = arith.cmpi ne, %10, %c0_i32_9 : i32
    scf.if %11 {
      %c0_10 = arith.constant 0 : index
      %c0_11 = arith.constant 0 : index
      %12 = vector.load %arg7[%c0_10, %c0_11] : memref<8x128xf32, #tpu.memory_space<vmem>>, vector<8x128xf32>
      %c0_12 = arith.constant 0 : index
      %c0_13 = arith.constant 0 : index
      %13 = vector.load %arg5[%c0_12, %c0_13] : memref<1x128xf32, #tpu.memory_space<vmem>>, vector<1x128xf32>
      %14 = vector.broadcast %13 : vector<1x128xf32> to vector<8x128xf32>
      %15 = arith.addf %12, %14 : vector<8x128xf32>
      %c0_14 = arith.constant 0 : index
      %c0_15 = arith.constant 0 : index
      %16 = vector.load %arg6[%c0_14, %c0_15] : memref<8x128xf32, #tpu.memory_space<vmem>>, vector<8x128xf32>
      tpu.vector_store %arg6[%c0_14, %c0_15], %15 {strides = array<i32>} : memref<8x128xf32, #tpu.memory_space<vmem>>, vector<8x128xf32>,
    } else {
    }
    return
  }
  func.func @transform_0(%arg0: i32, %arg1: i32, %arg2: i32) -> (i32, i32) {
    %c0_i32 = arith.constant 0 : i32
    return %arg0, %arg2 : i32, i32
  }
  func.func @transform_1(%arg0: i32, %arg1: i32, %arg2: i32) -> (i32, i32) {
    %c0_i32 = arith.constant 0 : i32
    return %arg2, %arg1 : i32, i32
  }
  func.func @transform_2(%arg0: i32, %arg1: i32, %arg2: i32) -> (i32, i32) {
    %c0_i32 = arith.constant 0 : i32
    %c0_i32_0 = arith.constant 0 : i32
    return %c0_i32, %arg1 : i32, i32
  }
  func.func @transform_3(%arg0: i32, %arg1: i32, %arg2: i32) -> (i32, i32) {
    %c0_i32 = arith.constant 0 : i32
    return %arg0, %arg1 : i32, i32
  }
}

</mosaic_0001>

<llo_original>
// kernel: lr_forward.1
$region0: #{lr_forward.1}
  #allocation0 [shape = 'u32[]', space=smem, size = 0x4, offset = 0x4, fixed_abs, tag = 'smem constant byte address 0x4 - core index']
  #allocation1 [shape = 'u32[144,128]{1,0:T(1,128)}', space=vmem, size = 0x12000, scoped, tag = 'internal scratch']
  #allocation2 [shape = 'f32[8,128]{1,0:T(8,128)}', space=vmem, size = 0x1000, scoped, tag = 'scratch operand']
  %s0 = inlined_call_operand.vmem [shape: f32[8,128], index: 0, kind: input, shape index: {}]
  %s1 = inlined_call_operand.hbm [shape: f32[128,128], index: 1, kind: input, shape index: {}]
  %s2 = inlined_call_operand.vmem [shape: f32[1,128], index: 2, kind: input, shape index: {}]
  %s3 = inlined_call_operand.hbm [shape: f32[8,128], index: 3, kind: output, shape index: {}]
  %s4 = sld [smem:[#allocation0]]
  $region34: #{lr_forward.1} parent=0
    _
  %s6 = ssub.s32 1, %s4
  %s7 = scalar_select 0, %s6, %s4
  $region1: #{lr_forward.1} parent=0
    #allocation3 [shape = 'u8[65536]{0}', space=vmem, size = 0x10000, scoped, tag = 'input window, operand 1, single buffered']
    #allocation4 [shape = 's32[1]{0}', space=sflag, size = 0x4, scoped, tag = 'scoped memory for lr_forward.1']
    #allocation5 [shape = 's32[1]{0}', space=sflag, size = 0x4, scoped, tag = 'scoped memory for lr_forward.1']
    #allocation6 [shape = 'u8[4096]{0}', space=vmem, size = 0x1000, scoped, tag = 'output window, operand 0, single buffered']
    %8 = vsyncpa [#allocation4], 0
    %9 = vsyncpa [#allocation5], 0
    // Predicated region
    $region2: #{lr_forward.1} parent=1 // pred_check
      _
    $region3: #{lr_forward.1} parent=1 // pred_check_branch
      %11 = sbr.rel (0) target = $region5
    $region4: #{lr_forward.1} parent=1 // pred_region
      _
    $region5: #{lr_forward.1} parent=1 // pred_fallthru
      _
    // Predicated region
    $region6: #{lr_forward.1} parent=1 // pred_check
      _
    $region7: #{lr_forward.1} parent=1 // pred_check_branch
      %13 = sbr.rel (0) target = $region9
    $region8: #{lr_forward.1} parent=1 // pred_region
      %s15 = ssub.s32 2048, 2048
      %16 = vsyncadd [#allocation4], %s15
      %s17 = sshll.u32 [#allocation3], 4
      %s18 = int_to_ptr.vmem [resolvable:$true] %s17
      %23 = dma.hbm_to_vmem [thread:$0]  %s1, 2048, %s18, [#allocation4], 128, 128, 8
    $region9: #{lr_forward.1} parent=1 // pred_fallthru
      _
    // Predicated region
    $region10: #{lr_forward.1} parent=1 // pred_check
      _
    $region11: #{lr_forward.1} parent=1 // pred_check_branch
      %25 = sbr.rel (0) target = $region13
    $region12: #{lr_forward.1} parent=1 // pred_region
      _
    $region13: #{lr_forward.1} parent=1 // pred_fallthru
      _
    // Predicated region
    $region14: #{lr_forward.1} parent=1 // pred_check
      _
    $region15: #{lr_forward.1} parent=1 // pred_check_branch
      %27 = sbr.rel (0) target = $region17
    $region16: #{lr_forward.1} parent=1 // pred_region
      %28 = dma.done [#allocation4], 2048
    $region17: #{lr_forward.1} parent=1 // pred_fallthru
      _
    %p29 = scmp.eq.s32.totalorder 0, 0
    // Predicated region
    $region18: #{lr_forward.1} parent=1 // pred_check
      %p30 = pneg %p29
    $region19: #{lr_forward.1} parent=1 // pred_check_branch
      %32 = sbr.rel (%p30) target = $region21
    $region20: #{lr_forward.1} parent=1 // pred_region
      %33 = vst [vmem:[#allocation2] sm:$0xff] 0.0
    $region21: #{lr_forward.1} parent=1 // pred_fallthru
      _
    %v34 = vld [vmem:[#allocation2] sm:$0xff]
    %v35 = vld [vmem:[%s0] sm:$0xff]
    %v36 = vld [vmem:[#allocation3] sm:$0xff]
    %v37 = vld [vmem:[#allocation3 + $0x8] sm:$0xff]
    %v38 = vld [vmem:[#allocation3 + $0x10] sm:$0xff]
    %v39 = vld [vmem:[#allocation3 + $0x18] sm:$0xff]
    %v40 = vld [vmem:[#allocation3 + $0x20] sm:$0xff]
    %v41 = vld [vmem:[#allocation3 + $0x28] sm:$0xff]
    %v42 = vld [vmem:[#allocation3 + $0x30] sm:$0xff]
    %v43 = vld [vmem:[#allocation3 + $0x38] sm:$0xff]
    %v44 = vld [vmem:[#allocation3 + $0x40] sm:$0xff]
    %v45 = vld [vmem:[#allocation3 + $0x48] sm:$0xff]
    %v46 = vld [vmem:[#allocation3 + $0x50] sm:$0xff]
    %v47 = vld [vmem:[#allocation3 + $0x58] sm:$0xff]
    %v48 = vld [vmem:[#allocation3 + $0x60] sm:$0xff]
    %v49 = vld [vmem:[#allocation3 + $0x68] sm:$0xff]
    %v50 = vld [vmem:[#allocation3 + $0x70] sm:$0xff]
    %v51 = vld [vmem:[#allocation3 + $0x78] sm:$0xff]
    %52 = vmatprep.subr.mxu0 0.0
    %53 = vmatpush1.msra.mxu0 %v51
    %54 = vmatprep.subr.mxu0 0.0
    %55 = vmatpush1.msra.mxu0 %v50
    %56 = vmatprep.subr.mxu0 0.0
    %57 = vmatpush1.msra.mxu0 %v49
    %58 = vmatprep.subr.mxu0 0.0
    %59 = vmatpush1.msra.mxu0 %v48
    %60 = vmatprep.subr.mxu0 0.0
    %61 = vmatpush1.msra.mxu0 %v47
    %62 = vmatprep.subr.mxu0 0.0
    %63 = vmatpush1.msra.mxu0 %v46
    %64 = vmatprep.subr.mxu0 0.0
    %65 = vmatpush1.msra.mxu0 %v45
    %66 = vmatprep.subr.mxu0 0.0
    %67 = vmatpush1.msra.mxu0 %v44
    %68 = vmatprep.subr.mxu0 0.0
    %69 = vmatpush1.msra.mxu0 %v43
    %70 = vmatprep.subr.mxu0 0.0
    %71 = vmatpush1.msra.mxu0 %v42
    %72 = vmatprep.subr.mxu0 0.0
    %73 = vmatpush1.msra.mxu0 %v41
    %74 = vmatprep.subr.mxu0 0.0
    %75 = vmatpush1.msra.mxu0 %v40
    %76 = vmatprep.subr.mxu0 0.0
    %77 = vmatpush1.msra.mxu0 %v39
    %78 = vmatprep.subr.mxu0 0.0
    %79 = vmatpush1.msra.mxu0 %v38
    %80 = vmatprep.subr.mxu0 0.0
    %81 = vmatpush1.msra.mxu0 %v37
    %82 = vmatprep.subr.mxu0 0.0
    %83 = vmatpush1.msra.mxu0 %v36
    %84 = vmatprep.subr.mxu0 0.0
    %85 = vmatpush2.msra.mxu0 0.0
    %86 = vmatprep.subr.mxu0 0.0
    %87 = vmatpush2.msra.mxu0 0.0
    %88 = vmatprep.subr.mxu0 0.0
    %89 = vmatpush2.msra.mxu0 0.0
    %90 = vmatprep.subr.mxu0 0.0
    %91 = vmatpush2.msra.mxu0 0.0
    %92 = vmatprep.subr.mxu0 0.0
    %93 = vmatpush2.msra.mxu0 0.0
    %94 = vmatprep.subr.mxu0 0.0
    %95 = vmatpush2.msra.mxu0 0.0
    %96 = vmatprep.subr.mxu0 0.0
    %97 = vmatpush2.msra.mxu0 0.0
    %98 = vmatprep.subr.mxu0 0.0
    %99 = vmatpush2.msra.mxu0 0.0
    %100 = vmatprep.subr.mxu0 0.0
    %101 = vmatpush2.msra.mxu0 0.0
    %102 = vmatprep.subr.mxu0 0.0
    %103 = vmatpush2.msra.mxu0 0.0
    %104 = vmatprep.subr.mxu0 0.0
    %105 = vmatpush2.msra.mxu0 0.0
    %106 = vmatprep.subr.mxu0 0.0
    %107 = vmatpush2.msra.mxu0 0.0
    %108 = vmatprep.subr.mxu0 0.0
    %109 = vmatpush2.msra.mxu0 0.0
    %110 = vmatprep.subr.mxu0 0.0
    %111 = vmatpush2.msra.mxu0 0.0
    %112 = vmatprep.subr.mxu0 0.0
    %113 = vmatpush2.msra.mxu0 0.0
    %114 = vmatprep.subr.mxu0 0.0
    %115 = vmatpush2.msra.mxu0 0.0
    %116 = vmatprep.mubr.f32.mxu0 0.0
    %117 = vmatmul.mubr.f32.gmra.mxu0 %v35
    %v118 = vpop.f32.mrf.mxu0
    %v119 = vadd.f32 0.0, %v118
    %v120 = vpop.f32.mrf.mxu0
    %121 = vdwg.mxu0
    %v122 = vadd.f32 %v34, %v119
    %123 = vst [vmem:[#allocation2] sm:$0xff] %v122
    // Predicated region
    $region22: #{lr_forward.1} parent=1 // pred_check
      %p124 = pneg %p29
    $region23: #{lr_forward.1} parent=1 // pred_check_branch
      %126 = sbr.rel (%p124) target = $region25
    $region24: #{lr_forward.1} parent=1 // pred_region
      %v127 = vld [vmem:[#allocation2] sm:$0xff]
      %v128 = vld [vmem:[%s2] sm:$0x1]
      %v130 = vlaneseq
      %v131 = vshrl.u32 %v130, 7
      %v132 = vsub.s32 0, %v131
      %v133 = vrot.slane %v128, %v132
      %v135 = vadd.f32 %v127, %v133
      %136 = vst [vmem:[#allocation6] sm:$0xff] %v135
    $region25: #{lr_forward.1} parent=1 // pred_fallthru
      _
    // Predicated region
    $region26: #{lr_forward.1} parent=1 // pred_check
      _
    $region27: #{lr_forward.1} parent=1 // pred_check_branch
      %138 = sbr.rel (0) target = $region29
    $region28: #{lr_forward.1} parent=1 // pred_region
      %s140 = ssub.s32 128, 128
      %141 = vsyncadd [#allocation5], %s140
      %s143 = sshll.u32 [#allocation6], 4
      %s144 = int_to_ptr.vmem [resolvable:$true] %s143
      %146 = dma.vmem_to_hbm [thread:$0]  %s144, 128, %s3, [#allocation5]
    $region29: #{lr_forward.1} parent=1 // pred_fallthru
      _
    // Predicated region
    $region30: #{lr_forward.1} parent=1 // pred_check
      _
    $region31: #{lr_forward.1} parent=1 // pred_check_branch
      %148 = sbr.rel (0) target = $region33
    $region32: #{lr_forward.1} parent=1 // pred_region
      %149 = dma.done [#allocation5], 128
    $region33: #{lr_forward.1} parent=1 // pred_fallthru
      _
    %150 = vsyncpa [#allocation4], 1
    %151 = vsyncpa [#allocation5], 1

</llo_original>
